<compile_context>
chip_gen: v7x
topology: tpu7x:2x2x1
jax: 0.10.0
libtpu: 0.0.40
codegen_flags: <defaults>
</compile_context>

<pallas_src>
import functools

import jax
import jax.numpy as jnp
from jax.experimental import pallas as pl
from jax.experimental.pallas import tpu as pltpu


_VMEM_BUDGET_BYTES = 16 * 1024 * 1024   # target per-grid-step working set
_VMEM_LIMIT_BYTES = 32 * 1024 * 1024    # scoped VMEM we request from Mosaic
_MAX_BN = 8                             # cap on batch-block unroll in-kernel


def _stats_kernel(x_ref, w_ref, stats_ref, *, bn):
    # x_ref:     (bn, C_in, tile_p)   batch/pixel block of the input
    # w_ref:     (C_out, C_in)        VMEM-resident weight
    # stats_ref: (C_out, 2)           per-grid-step PARTIAL sums: [:,0]=sum y,
    #                                 [:,1]=sum y^2  (reduced in the wrapper)
    w = w_ref[...]
    c_out = w.shape[0]
    ssum = jnp.zeros((c_out, 1), jnp.float32)
    ssq = jnp.zeros((c_out, 1), jnp.float32)
    for b in range(bn):  # static, small unroll
        # 1x1 conv == matmul over the channel dim (MXU), f32 accumulation.
        y = jnp.dot(w, x_ref[b], preferred_element_type=jnp.float32)
        ssum = ssum + jnp.sum(y, axis=1, keepdims=True)
        ssq = ssq + jnp.sum(y * y, axis=1, keepdims=True)
    stats_ref[:, 0:1] = ssum
    stats_ref[:, 1:2] = ssq


def _normalize_kernel(x_ref, w_ref, shift_ref, o_ref, *, bn):
    # Folded conv + BN + ReLU:  o = max(W' @ x + shift, 0)
    #   W'    = inv_std[:, None] * W      (folded in the wrapper)
    #   shift = -mean * inv_std           (C_out, 1), f32
    w = w_ref[...]
    shift = shift_ref[...]
    for b in range(bn):  # static, small unroll
        y = jnp.dot(w, x_ref[b], preferred_element_type=jnp.float32)
        o_ref[b] = jnp.maximum(y + shift, 0.0).astype(o_ref.dtype)


def _pick_tile_p(P, max_cols):
    """Pixel-tile: largest multiple-of-128 divisor of P fitting the budget."""
    if P <= max_cols:
        return P  # full-extent block is always legal
    t = (max_cols // 128) * 128
    while t >= 128:
        if P % t == 0:
            return t
        t -= 128
    if P % 128 == 0:
        return 128
    # TODO(synk): non-128-divisible P larger than the VMEM budget would need a
    # pl.cdiv grid plus an explicit pixel-validity mask in the stats kernel;
    # fall back to a single full-P block (correctness over performance).
    return P


def _pick_bn(N, tile_p, max_cols):
    """Batch-block: largest divisor of N (<= _MAX_BN) that keeps blocks in budget."""
    bn = 1
    for cand in range(1, min(N, _MAX_BN) + 1):
        if N % cand == 0 and cand * tile_p <= max_cols:
            bn = cand
    return bn


@functools.partial(jax.jit, static_argnames=("eps", "vmem_budget_bytes"))
def std_conv(x, weight, eps=1e-5, vmem_budget_bytes=_VMEM_BUDGET_BYTES):
    """x: (N, C_in, H, W); weight: (C_out, C_in) (1x1 conv kernel squeezed)."""
    N, C_in, H, W = x.shape
    C_out = weight.shape[0]
    P = H * W
    R = N * P  # pixels the BatchNorm statistics reduce over

    xr = x.reshape(N, C_in, P)            # free reshape, native dtype (no f32 pre-cast)
    in_b = jnp.dtype(xr.dtype).itemsize
    out_dtype = x.dtype
    out_b = jnp.dtype(out_dtype).itemsize

    # Per-(batch-elem, pixel-column) VMEM bytes: 2x double-buffered x block,
    # 2x double-buffered output block (pass 2), plus f32 y / y^2 temps.
    per_col = 2 * C_in * in_b + 2 * C_out * out_b + 8 * C_out
    max_cols = max(128, vmem_budget_bytes // per_col)
    tile_p = _pick_tile_p(P, max_cols)
    bn = _pick_bn(N, tile_p, max_cols)
    nb, pb = N // bn, P // tile_p
    grid = (nb, pb)

    w32 = jnp.asarray(weight, jnp.float32)
    w_in = w32.astype(xr.dtype)           # MXU input dtype matches x

    matmul_flops = 2 * R * C_in * C_out
    x_bytes = R * C_in * in_b
    w_bytes = C_out * C_in * in_b

    # ---- Pass 1: per-grid-step partial sum / sum-of-squares of y = conv(x) ----
    # Each step owns its output block -> both axes "parallel" (megacore-safe).
    stats_parts = pl.pallas_call(
        functools.partial(_stats_kernel, bn=bn),
        out_shape=jax.ShapeDtypeStruct((nb, pb, C_out, 2), jnp.float32),
        grid=grid,
        in_specs=[
            pl.BlockSpec((bn, C_in, tile_p), lambda i, j: (i, 0, j)),
            pl.BlockSpec((C_out, C_in), lambda i, j: (0, 0)),
        ],
        out_specs=pl.BlockSpec((None, None, C_out, 2), lambda i, j: (i, j, 0, 0)),
        compiler_params=pltpu.CompilerParams(
            dimension_semantics=("parallel", "parallel"),
            vmem_limit_bytes=_VMEM_LIMIT_BYTES),
        cost_estimate=pl.CostEstimate(
            flops=matmul_flops + 3 * R * C_out, transcendentals=0,
            bytes_accessed=x_bytes + w_bytes + nb * pb * C_out * 2 * 4),
    )(xr, w_in)

    # BatchNorm2d training-mode batch stats: biased variance, eps inside rsqrt.
    tot = jnp.sum(stats_parts, axis=(0, 1))          # (C_out, 2), f32
    mean = tot[:, 0] / R
    # f32 accumulation; clamp guards tiny negative E[y^2] - mean^2 round-off.
    var = jnp.maximum(tot[:, 1] / R - mean * mean, 0.0)
    inv_std = jax.lax.rsqrt(var + eps)

    # Fold BN scale into the weights; only an additive shift remains in-kernel.
    w_fold = (w32 * inv_std[:, None]).astype(xr.dtype)     # (C_out, C_in)
    shift = (-(mean * inv_std))[:, None].astype(jnp.float32)  # (C_out, 1)

    # ---- Pass 2: recompute conv (cheaper than a y round-trip for these
    #      channel counts), add shift, ReLU; fully parallel over tiles. ----
    out = pl.pallas_call(
        functools.partial(_normalize_kernel, bn=bn),
        out_shape=jax.ShapeDtypeStruct((N, C_out, P), out_dtype),
        grid=grid,
        in_specs=[
            pl.BlockSpec((bn, C_in, tile_p), lambda i, j: (i, 0, j)),
            pl.BlockSpec((C_out, C_in), lambda i, j: (0, 0)),
            pl.BlockSpec((C_out, 1), lambda i, j: (0, 0)),
        ],
        out_specs=pl.BlockSpec((bn, C_out, tile_p), lambda i, j: (i, 0, j)),
        compiler_params=pltpu.CompilerParams(
            dimension_semantics=("parallel", "parallel"),
            vmem_limit_bytes=_VMEM_LIMIT_BYTES),
        cost_estimate=pl.CostEstimate(
            flops=matmul_flops + 2 * R * C_out, transcendentals=0,
            bytes_accessed=x_bytes + w_bytes + C_out * 4 + R * C_out * out_b),
    )(xr, w_fold, shift)

    return out.reshape(N, C_out, H, W)   # free reshape, already NCHW


def _reference(x, weight, eps=1e-5):
    # Pure-JAX reference of Conv2d(1x1, no bias) + BN(training stats) + ReLU.
    y = jnp.einsum("nchw,oc->nohw", x, weight)
    mean = jnp.mean(y, axis=(0, 2, 3), keepdims=True)
    var = jnp.mean((y - mean) ** 2, axis=(0, 2, 3), keepdims=True)
    return jnp.maximum((y - mean) / jnp.sqrt(var + eps), 0.0)


if __name__ == "__main__":
    key = jax.random.PRNGKey(0)
    kx, kw = jax.random.split(key)

    # Primary small test: N=2, C_in=4, C_out=8, H=W=16 (single big block).
    N, C_in, C_out, H, W = 2, 4, 8, 16, 16
    x = jax.random.normal(kx, (N, C_in, H, W), dtype=jnp.float32)
    weight = jax.random.normal(kw, (C_out, C_in), dtype=jnp.float32) * 0.1

    out = jax.block_until_ready(std_conv(x, weight))
    ref = _reference(x, weight)
    assert out.shape == (N, C_out, H, W)
    assert jnp.allclose(out, ref, atol=1e-4, rtol=1e-4), "mismatch vs reference"

    # Second test: shrink the VMEM budget so both grid axes get multiple steps
    # (exercises batch-blocking, pixel tiling and the partial-stats reduction).
    x2 = jax.random.normal(kx, (2, 4, 32, 32), dtype=jnp.float32)
    out2 = jax.block_until_ready(std_conv(x2, weight, vmem_budget_bytes=64 * 1024))
    ref2 = _reference(x2, weight)
    assert out2.shape == (2, C_out, 32, 32)
    assert jnp.allclose(out2, ref2, atol=1e-4, rtol=1e-4), "mismatch vs reference (tiled)"

    print("KERNEL_OK")
</pallas_src>

<mosaic_0001>
module attributes {stable_mosaic.version = 11 : i64} {
  func.func @_stats_kernel(%arg0: i32, %arg1: i32, %arg2: memref<2x4x256xf32, #tpu.memory_space<vmem>>, %arg3: memref<8x4xf32, #tpu.memory_space<vmem>>, %arg4: memref<1x1x8x2xf32, #tpu.memory_space<vmem>>) attributes {dimension_semantics = [#tpu.dimension_semantics<parallel>, #tpu.dimension_semantics<parallel>], iteration_bounds = array<i64: 1, 1>, scalar_prefetch = 0 : i64, scratch_operands = 0 : i64, tpu.core_type = #tpu.core_type<tc>, window_params = [{transform_indices = @transform_0, window_bounds = array<i64: 2, 4, 256>}, {pipeline_mode = #tpu.pipeline_mode<synchronous>, transform_indices = @transform_1, window_bounds = array<i64: 8, 4>}, {transform_indices = @transform_2, window_bounds = array<i64: 1, 1, 8, 2>}]} {
    %c0 = arith.constant 0 : index
    %c0_0 = arith.constant 0 : index
    %0 = vector.load %arg3[%c0, %c0_0] : memref<8x4xf32, #tpu.memory_space<vmem>>, vector<8x4xf32>
    %cst = arith.constant 0.000000e+00 : f32
    %1 = vector.broadcast %cst : f32 to vector<8x1xf32>
    %cst_1 = arith.constant 0.000000e+00 : f32
    %2 = vector.broadcast %cst_1 : f32 to vector<8x1xf32>
    %c0_2 = arith.constant 0 : index
    %c0_3 = arith.constant 0 : index
    %c0_4 = arith.constant 0 : index
    %3 = vector.load %arg2[%c0_2, %c0_3, %c0_4] : memref<2x4x256xf32, #tpu.memory_space<vmem>>, vector<1x4x256xf32>
    %4 = vector.shape_cast %3 : vector<1x4x256xf32> to vector<4x256xf32>
    %cst_5 = arith.constant dense<0.000000e+00> : vector<8x256xf32>
    %5 = tpu.matmul %0, %4, %cst_5 {dimension_numbers = #tpu.dot_dimension_numbers<[1], [0], [0], [1], [0, 0, 1, 1], [], []>} : vector<8x4xf32>, vector<4x256xf32>, vector<8x256xf32> -> vector<8x256xf32>
    %cst_6 = arith.constant dense<0.000000e+00> : vector<8xf32>
    %6 = vector.multi_reduction <add>, %5, %cst_6 [1] : vector<8x256xf32> to vector<8xf32>
    %7 = vector.shape_cast %6 : vector<8xf32> to vector<8x1xf32>
    %8 = arith.addf %1, %7 : vector<8x1xf32>
    %9 = arith.mulf %5, %5 : vector<8x256xf32>
    %cst_7 = arith.constant dense<0.000000e+00> : vector<8xf32>
    %10 = vector.multi_reduction <add>, %9, %cst_7 [1] : vector<8x256xf32> to vector<8xf32>
    %11 = vector.shape_cast %10 : vector<8xf32> to vector<8x1xf32>
    %12 = arith.addf %2, %11 : vector<8x1xf32>
    %c1 = arith.constant 1 : index
    %c0_8 = arith.constant 0 : index
    %c0_9 = arith.constant 0 : index
    %13 = vector.load %arg2[%c1, %c0_8, %c0_9] : memref<2x4x256xf32, #tpu.memory_space<vmem>>, vector<1x4x256xf32>
    %14 = vector.shape_cast %13 : vector<1x4x256xf32> to vector<4x256xf32>
    %cst_10 = arith.constant dense<0.000000e+00> : vector<8x256xf32>
    %15 = tpu.matmul %0, %14, %cst_10 {dimension_numbers = #tpu.dot_dimension_numbers<[1], [0], [0], [1], [0, 0, 1, 1], [], []>} : vector<8x4xf32>, vector<4x256xf32>, vector<8x256xf32> -> vector<8x256xf32>
    %cst_11 = arith.constant dense<0.000000e+00> : vector<8xf32>
    %16 = vector.multi_reduction <add>, %15, %cst_11 [1] : vector<8x256xf32> to vector<8xf32>
    %17 = vector.shape_cast %16 : vector<8xf32> to vector<8x1xf32>
    %18 = arith.addf %8, %17 : vector<8x1xf32>
    %19 = arith.mulf %15, %15 : vector<8x256xf32>
    %cst_12 = arith.constant dense<0.000000e+00> : vector<8xf32>
    %20 = vector.multi_reduction <add>, %19, %cst_12 [1] : vector<8x256xf32> to vector<8xf32>
    %21 = vector.shape_cast %20 : vector<8xf32> to vector<8x1xf32>
    %22 = arith.addf %12, %21 : vector<8x1xf32>
    %c0_13 = arith.constant 0 : index
    %c0_14 = arith.constant 0 : index
    %c0_15 = arith.constant 0 : index
    %c0_16 = arith.constant 0 : index
    %23 = vector.load %arg4[%c0_13, %c0_14, %c0_15, %c0_16] : memref<1x1x8x2xf32, #tpu.memory_space<vmem>>, vector<1x1x8x1xf32>
    %24 = vector.shape_cast %23 : vector<1x1x8x1xf32> to vector<8x1xf32>
    %25 = vector.shape_cast %18 : vector<8x1xf32> to vector<1x1x8x1xf32>
    tpu.vector_store %arg4[%c0_13, %c0_14, %c0_15, %c0_16], %25 {strides = array<i32>} : memref<1x1x8x2xf32, #tpu.memory_space<vmem>>, vector<1x1x8x1xf32>,
    %c0_17 = arith.constant 0 : index
    %c0_18 = arith.constant 0 : index
    %c0_19 = arith.constant 0 : index
    %c1_20 = arith.constant 1 : index
    %26 = vector.load %arg4[%c0_17, %c0_18, %c0_19, %c1_20] : memref<1x1x8x2xf32, #tpu.memory_space<vmem>>, vector<1x1x8x1xf32>
    %27 = vector.shape_cast %26 : vector<1x1x8x1xf32> to vector<8x1xf32>
    %28 = vector.shape_cast %22 : vector<8x1xf32> to vector<1x1x8x1xf32>
    tpu.vector_store %arg4[%c0_17, %c0_18, %c0_19, %c1_20], %28 {strides = array<i32>} : memref<1x1x8x2xf32, #tpu.memory_space<vmem>>, vector<1x1x8x1xf32>,
    return
  }
  func.func @transform_0(%arg0: i32, %arg1: i32) -> (i32, i32, i32) {
    %c0_i32 = arith.constant 0 : i32
    %c0_i32_0 = arith.constant 0 : i32
    return %arg0, %c0_i32, %arg1 : i32, i32, i32
  }
  func.func @transform_1(%arg0: i32, %arg1: i32) -> (i32, i32) {
    %c0_i32 = arith.constant 0 : i32
    %c0_i32_0 = arith.constant 0 : i32
    %c0_i32_1 = arith.constant 0 : i32
    return %c0_i32, %c0_i32_0 : i32, i32
  }
  func.func @transform_2(%arg0: i32, %arg1: i32) -> (i32, i32, i32, i32) {
    %c0_i32 = arith.constant 0 : i32
    %c0_i32_0 = arith.constant 0 : i32
    %c0_i32_1 = arith.constant 0 : i32
    return %arg0, %arg1, %c0_i32, %c0_i32_0 : i32, i32, i32, i32
  }
}

module attributes {stable_mosaic.version = 11 : i64} {
  func.func @_normalize_kernel(%arg0: i32, %arg1: i32, %arg2: memref<2x4x256xf32, #tpu.memory_space<vmem>>, %arg3: memref<8x4xf32, #tpu.memory_space<vmem>>, %arg4: memref<8x1xf32, #tpu.memory_space<vmem>>, %arg5: memref<2x8x256xf32, #tpu.memory_space<vmem>>) attributes {dimension_semantics = [#tpu.dimension_semantics<parallel>, #tpu.dimension_semantics<parallel>], iteration_bounds = array<i64: 1, 1>, scalar_prefetch = 0 : i64, scratch_operands = 0 : i64, tpu.core_type = #tpu.core_type<tc>, window_params = [{transform_indices = @transform_0, window_bounds = array<i64: 2, 4, 256>}, {pipeline_mode = #tpu.pipeline_mode<synchronous>, transform_indices = @transform_1, window_bounds = array<i64: 8, 4>}, {pipeline_mode = #tpu.pipeline_mode<synchronous>, transform_indices = @transform_2, window_bounds = array<i64: 8, 1>}, {transform_indices = @transform_3, window_bounds = array<i64: 2, 8, 256>}]} {
    %c0 = arith.constant 0 : index
    %c0_0 = arith.constant 0 : index
    %0 = vector.load %arg3[%c0, %c0_0] : memref<8x4xf32, #tpu.memory_space<vmem>>, vector<8x4xf32>
    %c0_1 = arith.constant 0 : index
    %c0_2 = arith.constant 0 : index
    %1 = vector.load %arg4[%c0_1, %c0_2] : memref<8x1xf32, #tpu.memory_space<vmem>>, vector<8x1xf32>
    %c0_3 = arith.constant 0 : index
    %c0_4 = arith.constant 0 : index
    %c0_5 = arith.constant 0 : index
    %2 = vector.load %arg2[%c0_3, %c0_4, %c0_5] : memref<2x4x256xf32, #tpu.memory_space<vmem>>, vector<1x4x256xf32>
    %3 = vector.shape_cast %2 : vector<1x4x256xf32> to vector<4x256xf32>
    %cst = arith.constant dense<0.000000e+00> : vector<8x256xf32>
    %4 = tpu.matmul %0, %3, %cst {dimension_numbers = #tpu.dot_dimension_numbers<[1], [0], [0], [1], [0, 0, 1, 1], [], []>} : vector<8x4xf32>, vector<4x256xf32>, vector<8x256xf32> -> vector<8x256xf32>
    %5 = vector.broadcast %1 : vector<8x1xf32> to vector<8x256xf32>
    %6 = arith.addf %4, %5 : vector<8x256xf32>
    %cst_6 = arith.constant 0.000000e+00 : f32
    %7 = vector.broadcast %cst_6 : f32 to vector<8x256xf32>
    %8 = arith.maximumf %6, %7 : vector<8x256xf32>
    %c0_7 = arith.constant 0 : index
    %c0_8 = arith.constant 0 : index
    %c0_9 = arith.constant 0 : index
    %9 = vector.load %arg5[%c0_7, %c0_8, %c0_9] : memref<2x8x256xf32, #tpu.memory_space<vmem>>, vector<1x8x256xf32>
    %10 = vector.shape_cast %9 : vector<1x8x256xf32> to vector<8x256xf32>
    %11 = vector.shape_cast %8 : vector<8x256xf32> to vector<1x8x256xf32>
    tpu.vector_store %arg5[%c0_7, %c0_8, %c0_9], %11 {strides = array<i32>} : memref<2x8x256xf32, #tpu.memory_space<vmem>>, vector<1x8x256xf32>,
    %c1 = arith.constant 1 : index
    %c0_10 = arith.constant 0 : index
    %c0_11 = arith.constant 0 : index
    %12 = vector.load %arg2[%c1, %c0_10, %c0_11] : memref<2x4x256xf32, #tpu.memory_space<vmem>>, vector<1x4x256xf32>
    %13 = vector.shape_cast %12 : vector<1x4x256xf32> to vector<4x256xf32>
    %cst_12 = arith.constant dense<0.000000e+00> : vector<8x256xf32>
    %14 = tpu.matmul %0, %13, %cst_12 {dimension_numbers = #tpu.dot_dimension_numbers<[1], [0], [0], [1], [0, 0, 1, 1], [], []>} : vector<8x4xf32>, vector<4x256xf32>, vector<8x256xf32> -> vector<8x256xf32>
    %15 = vector.broadcast %1 : vector<8x1xf32> to vector<8x256xf32>
    %16 = arith.addf %14, %15 : vector<8x256xf32>
    %cst_13 = arith.constant 0.000000e+00 : f32
    %17 = vector.broadcast %cst_13 : f32 to vector<8x256xf32>
    %18 = arith.maximumf %16, %17 : vector<8x256xf32>
    %c1_14 = arith.constant 1 : index
    %c0_15 = arith.constant 0 : index
    %c0_16 = arith.constant 0 : index
    %19 = vector.load %arg5[%c1_14, %c0_15, %c0_16] : memref<2x8x256xf32, #tpu.memory_space<vmem>>, vector<1x8x256xf32>
    %20 = vector.shape_cast %19 : vector<1x8x256xf32> to vector<8x256xf32>
    %21 = vector.shape_cast %18 : vector<8x256xf32> to vector<1x8x256xf32>
    tpu.vector_store %arg5[%c1_14, %c0_15, %c0_16], %21 {strides = array<i32>} : memref<2x8x256xf32, #tpu.memory_space<vmem>>, vector<1x8x256xf32>,
    return
  }
  func.func @transform_0(%arg0: i32, %arg1: i32) -> (i32, i32, i32) {
    %c0_i32 = arith.constant 0 : i32
    %c0_i32_0 = arith.constant 0 : i32
    return %arg0, %c0_i32, %arg1 : i32, i32, i32
  }
  func.func @transform_1(%arg0: i32, %arg1: i32) -> (i32, i32) {
    %c0_i32 = arith.constant 0 : i32
    %c0_i32_0 = arith.constant 0 : i32
    %c0_i32_1 = arith.constant 0 : i32
    return %c0_i32, %c0_i32_0 : i32, i32
  }
  func.func @transform_2(%arg0: i32, %arg1: i32) -> (i32, i32) {
    %c0_i32 = arith.constant 0 : i32
    %c0_i32_0 = arith.constant 0 : i32
    %c0_i32_1 = arith.constant 0 : i32
    return %c0_i32, %c0_i32_0 : i32, i32
  }
  func.func @transform_3(%arg0: i32, %arg1: i32) -> (i32, i32, i32) {
    %c0_i32 = arith.constant 0 : i32
    %c0_i32_0 = arith.constant 0 : i32
    return %arg0, %c0_i32, %arg1 : i32, i32, i32
  }
}

</mosaic_0001>

<llo_original>
// kernel: std_conv.2
$region0: #{std_conv.2}
  #allocation0 [shape = 'u32[]', space=smem, size = 0x4, offset = 0x4, fixed_abs, tag = 'smem constant byte address 0x4 - core index']
  #allocation1 [shape = 'u32[144,128]{1,0:T(1,128)}', space=vmem, size = 0x12000, scoped, tag = 'internal scratch']
  %s0 = inlined_call_operand.vmem [shape: f32[2,4,256], index: 0, kind: input, shape index: {}]
  %s1 = inlined_call_operand.vmem [shape: f32[8,4], index: 1, kind: input, shape index: {}]
  %s2 = inlined_call_operand.vmem [shape: f32[1,1,8,2], index: 2, kind: output, shape index: {}]
  %s3 = sld [smem:[#allocation0]]
  $region18: #{std_conv.2} parent=0
    _
  %s5 = ssub.s32 1, %s3
  %s6 = scalar_select 0, %s5, %s3
  // Predicated region
  $region2: #{std_conv.2} parent=0 // pred_check
    _
  $region3: #{std_conv.2} parent=0 // pred_check_branch
    %8 = sbr.rel (0) target = $region5
  $region4: #{std_conv.2} parent=0 // pred_region
    _
  $region5: #{std_conv.2} parent=0 // pred_fallthru
    _
  // Predicated region
  $region6: #{std_conv.2} parent=0 // pred_check
    _
  $region7: #{std_conv.2} parent=0 // pred_check_branch
    %10 = sbr.rel (0) target = $region9
  $region8: #{std_conv.2} parent=0 // pred_region
    _
  $region9: #{std_conv.2} parent=0 // pred_fallthru
    _
  %v11 = vld [vmem:[%s1] sm:$0xff]
  %v12 = vld [vmem:[%s0] sm:$0xff]
  %v14 = vcombine.high %v12, %v12
  %vm15 = vcmask 31744
  %v17 = vsel %vm15, %v11, 0
  %vm19 = vcmask 1043456
  %v20 = vsel %vm19, %v12, 0
  %v22 = vsel %vm19, %v14, 0
  %24 = vmatprep.subr.mxu0 %v22
  %25 = vmatpush1.msra.mxu0 %v20
  %26 = vmatprep.subr.mxu0 0.0
  %27 = vmatpush1.msra.mxu0 0.0
  %28 = vmatprep.subr.mxu0 0.0
  %29 = vmatpush1.msra.mxu0 0.0
  %30 = vmatprep.subr.mxu0 0.0
  %31 = vmatpush1.msra.mxu0 0.0
  %32 = vmatprep.subr.mxu0 0.0
  %33 = vmatpush1.msra.mxu0 0.0
  %34 = vmatprep.subr.mxu0 0.0
  %35 = vmatpush1.msra.mxu0 0.0
  %36 = vmatprep.subr.mxu0 0.0
  %37 = vmatpush1.msra.mxu0 0.0
  %38 = vmatprep.subr.mxu0 0.0
  %39 = vmatpush1.msra.mxu0 0.0
  %40 = vmatprep.subr.mxu0 0.0
  %41 = vmatpush1.msra.mxu0 0.0
  %42 = vmatprep.subr.mxu0 0.0
  %43 = vmatpush1.msra.mxu0 0.0
  %44 = vmatprep.subr.mxu0 0.0
  %45 = vmatpush1.msra.mxu0 0.0
  %46 = vmatprep.subr.mxu0 0.0
  %47 = vmatpush1.msra.mxu0 0.0
  %48 = vmatprep.subr.mxu0 0.0
  %49 = vmatpush1.msra.mxu0 0.0
  %50 = vmatprep.subr.mxu0 0.0
  %51 = vmatpush1.msra.mxu0 0.0
  %52 = vmatprep.subr.mxu0 0.0
  %53 = vmatpush1.msra.mxu0 0.0
  %54 = vmatprep.subr.mxu0 0.0
  %55 = vmatpush1.msra.mxu0 0.0
  %56 = vmatprep.subr.mxu0 0.0
  %57 = vmatpush1.msra.mxu0 0.0
  %58 = vmatprep.subr.mxu0 0.0
  %59 = vmatpush1.msra.mxu0 0.0
  %60 = vmatprep.subr.mxu0 0.0
  %61 = vmatpush1.msra.mxu0 0.0
  %62 = vmatprep.subr.mxu0 0.0
  %63 = vmatpush1.msra.mxu0 0.0
  %64 = vmatprep.subr.mxu0 0.0
  %65 = vmatpush1.msra.mxu0 0.0
  %66 = vmatprep.subr.mxu0 0.0
  %67 = vmatpush1.msra.mxu0 0.0
  %68 = vmatprep.subr.mxu0 0.0
  %69 = vmatpush1.msra.mxu0 0.0
  %70 = vmatprep.subr.mxu0 0.0
  %71 = vmatpush1.msra.mxu0 0.0
  %72 = vmatprep.subr.mxu0 0.0
  %73 = vmatpush1.msra.mxu0 0.0
  %74 = vmatprep.subr.mxu0 0.0
  %75 = vmatpush1.msra.mxu0 0.0
  %76 = vmatprep.subr.mxu0 0.0
  %77 = vmatpush1.msra.mxu0 0.0
  %78 = vmatprep.subr.mxu0 0.0
  %79 = vmatpush1.msra.mxu0 0.0
  %80 = vmatprep.subr.mxu0 0.0
  %81 = vmatpush1.msra.mxu0 0.0
  %82 = vmatprep.subr.mxu0 0.0
  %83 = vmatpush1.msra.mxu0 0.0
  %84 = vmatprep.subr.mxu0 0.0
  %85 = vmatpush1.msra.mxu0 0.0
  %86 = vmatprep.subr.mxu0 0.0
  %87 = vmatpush1.msra.mxu0 0.0
  %88 = vmatprep.mubr.f32.mxu0 0.0
  %89 = vmatmul.mubr.f32.gmra.mrb[0].mxu0 %v17
  %v90 = vpop.f32.mrb[0].mxu0
  %v91 = vadd.f32 0.0, %v90
  %v92 = vpop.f32.mrb[0].mxu0
  %v93 = vadd.f32 0.0, %v92
  %94 = vdwg.mxu0
  %v95 = vadd.f32 %v91, %v93
  %96 = vadd.xlane.f32.xlu0 %v95
  %v97 = vpop.xlane.xlu0 %96
  %v98 = vadd.f32 %v97, 0.0
  %v99 = vmul.f32 %v91, %v91
  %v100 = vmul.f32 %v93, %v93
  %v101 = vadd.f32 %v99, %v100
  %102 = vadd.xlane.f32.xlu0 %v101
  %v103 = vpop.xlane.xlu0 %102
  %v104 = vadd.f32 %v103, 0.0
  %s105 = scalar_lea.vmem %s0, 8
  %v106 = vld [vmem:[%s105] sm:$0xff]
  %v108 = vcombine.high %v106, %v106
  %v109 = vsel %vm19, %v106, 0
  %v111 = vsel %vm19, %v108, 0
  %113 = vmatprep.subr.mxu0 %v111
  %114 = vmatpush1.msra.mxu0 %v109
  %115 = vmatprep.subr.mxu0 0.0
  %116 = vmatpush1.msra.mxu0 0.0
  %117 = vmatprep.subr.mxu0 0.0
  %118 = vmatpush1.msra.mxu0 0.0
  %119 = vmatprep.subr.mxu0 0.0
  %120 = vmatpush1.msra.mxu0 0.0
  %121 = vmatprep.subr.mxu0 0.0
  %122 = vmatpush1.msra.mxu0 0.0
  %123 = vmatprep.subr.mxu0 0.0
  %124 = vmatpush1.msra.mxu0 0.0
  %125 = vmatprep.subr.mxu0 0.0
  %126 = vmatpush1.msra.mxu0 0.0
  %127 = vmatprep.subr.mxu0 0.0
  %128 = vmatpush1.msra.mxu0 0.0
  %129 = vmatprep.subr.mxu0 0.0
  %130 = vmatpush1.msra.mxu0 0.0
  %131 = vmatprep.subr.mxu0 0.0
  %132 = vmatpush1.msra.mxu0 0.0
  %133 = vmatprep.subr.mxu0 0.0
  %134 = vmatpush1.msra.mxu0 0.0
  %135 = vmatprep.subr.mxu0 0.0
  %136 = vmatpush1.msra.mxu0 0.0
  %137 = vmatprep.subr.mxu0 0.0
  %138 = vmatpush1.msra.mxu0 0.0
  %139 = vmatprep.subr.mxu0 0.0
  %140 = vmatpush1.msra.mxu0 0.0
  %141 = vmatprep.subr.mxu0 0.0
  %142 = vmatpush1.msra.mxu0 0.0
  %143 = vmatprep.subr.mxu0 0.0
  %144 = vmatpush1.msra.mxu0 0.0
  %145 = vmatprep.subr.mxu0 0.0
  %146 = vmatpush1.msra.mxu0 0.0
  %147 = vmatprep.subr.mxu0 0.0
  %148 = vmatpush1.msra.mxu0 0.0
  %149 = vmatprep.subr.mxu0 0.0
  %150 = vmatpush1.msra.mxu0 0.0
  %151 = vmatprep.subr.mxu0 0.0
  %152 = vmatpush1.msra.mxu0 0.0
  %153 = vmatprep.subr.mxu0 0.0
  %154 = vmatpush1.msra.mxu0 0.0
  %155 = vmatprep.subr.mxu0 0.0
  %156 = vmatpush1.msra.mxu0 0.0
  %157 = vmatprep.subr.mxu0 0.0
  %158 = vmatpush1.msra.mxu0 0.0
  %159 = vmatprep.subr.mxu0 0.0
  %160 = vmatpush1.msra.mxu0 0.0
  %161 = vmatprep.subr.mxu0 0.0
  %162 = vmatpush1.msra.mxu0 0.0
  %163 = vmatprep.subr.mxu0 0.0
  %164 = vmatpush1.msra.mxu0 0.0
  %165 = vmatprep.subr.mxu0 0.0
  %166 = vmatpush1.msra.mxu0 0.0
  %167 = vmatprep.subr.mxu0 0.0
  %168 = vmatpush1.msra.mxu0 0.0
  %169 = vmatprep.subr.mxu0 0.0
  %170 = vmatpush1.msra.mxu0 0.0
  %171 = vmatprep.subr.mxu0 0.0
  %172 = vmatpush1.msra.mxu0 0.0
  %173 = vmatprep.subr.mxu0 0.0
  %174 = vmatpush1.msra.mxu0 0.0
  %175 = vmatprep.subr.mxu0 0.0
  %176 = vmatpush1.msra.mxu0 0.0
  %177 = vmatprep.mubr.f32.mxu0 0.0
  %178 = vmatmul.mubr.f32.gmra.mrb[0].mxu0 %v17
  %v179 = vpop.f32.mrb[0].mxu0
  %v180 = vadd.f32 0.0, %v179
  %v181 = vpop.f32.mrb[0].mxu0
  %v182 = vadd.f32 0.0, %v181
  %183 = vdwg.mxu0
  %v184 = vadd.f32 %v180, %v182
  %185 = vadd.xlane.f32.xlu0 %v184
  %v186 = vpop.xlane.xlu0 %185
  %v187 = vadd.f32 %v98, %v186
  %v188 = vmul.f32 %v180, %v180
  %v189 = vmul.f32 %v182, %v182
  %v190 = vadd.f32 %v188, %v189
  %191 = vadd.xlane.f32.xlu0 %v190
  %v192 = vpop.xlane.xlu0 %191
  %v193 = vadd.f32 %v104, %v192
  %vm194 = vcmask 7168
  %195 = vst.msk [vmem:[%s2] sm:$0xff] %vm194, %v187
  %vm196 = vcmask 15368
  %197 = vst.msk [vmem:[%s2] sm:$0xff] %vm196, %v193
  // Predicated region
  $region10: #{std_conv.2} parent=0 // pred_check
    _
  $region11: #{std_conv.2} parent=0 // pred_check_branch
    %199 = sbr.rel (0) target = $region13
  $region12: #{std_conv.2} parent=0 // pred_region
    _
  $region13: #{std_conv.2} parent=0 // pred_fallthru
    _
  // Predicated region
  $region14: #{std_conv.2} parent=0 // pred_check
    _
  $region15: #{std_conv.2} parent=0 // pred_check_branch
    %201 = sbr.rel (0) target = $region17
  $region16: #{std_conv.2} parent=0 // pred_region
    _
  $region17: #{std_conv.2} parent=0 // pred_fallthru
    _

// kernel: std_conv.3
$region0: #{std_conv.3}
  #allocation0 [shape = 'u32[]', space=smem, size = 0x4, offset = 0x4, fixed_abs, tag = 'smem constant byte address 0x4 - core index']
  #allocation1 [shape = 'u32[144,128]{1,0:T(1,128)}', space=vmem, size = 0x12000, scoped, tag = 'internal scratch']
  %s0 = inlined_call_operand.vmem [shape: f32[2,4,256], index: 0, kind: input, shape index: {}]
  %s1 = inlined_call_operand.vmem [shape: f32[8,4], index: 1, kind: input, shape index: {}]
  %s2 = inlined_call_operand.vmem [shape: f32[8,1], index: 2, kind: input, shape index: {}]
  %s3 = inlined_call_operand.vmem [shape: f32[2,8,256], index: 3, kind: output, shape index: {}]
  %s4 = sld [smem:[#allocation0]]
  $region22: #{std_conv.3} parent=0
    _
  %s6 = ssub.s32 1, %s4
  %s7 = scalar_select 0, %s6, %s4
  // Predicated region
  $region2: #{std_conv.3} parent=0 // pred_check
    _
  $region3: #{std_conv.3} parent=0 // pred_check_branch
    %9 = sbr.rel (0) target = $region5
  $region4: #{std_conv.3} parent=0 // pred_region
    _
  $region5: #{std_conv.3} parent=0 // pred_fallthru
    _
  // Predicated region
  $region6: #{std_conv.3} parent=0 // pred_check
    _
  $region7: #{std_conv.3} parent=0 // pred_check_branch
    %11 = sbr.rel (0) target = $region9
  $region8: #{std_conv.3} parent=0 // pred_region
    _
  $region9: #{std_conv.3} parent=0 // pred_fallthru
    _
  // Predicated region
  $region10: #{std_conv.3} parent=0 // pred_check
    _
  $region11: #{std_conv.3} parent=0 // pred_check_branch
    %13 = sbr.rel (0) target = $region13
  $region12: #{std_conv.3} parent=0 // pred_region
    _
  $region13: #{std_conv.3} parent=0 // pred_fallthru
    _
  %v14 = vld [vmem:[%s1] sm:$0xff]
  %v15 = vld [vmem:[%s2] sm:$0xff]
  %v16 = vld [vmem:[%s0] sm:$0xff]
  %18 = vset.pattern.permute.xlu0 0
  %19 = vperm.xlu0 %18, %v15
  %v20 = vpop.permute.xlu0 %19
  %v23 = vcombine.high %v16, %v16
  %vm24 = vcmask 31744
  %v26 = vsel %vm24, %v14, 0
  %vm28 = vcmask 1043456
  %v29 = vsel %vm28, %v16, 0
  %v31 = vsel %vm28, %v23, 0
  %33 = vmatprep.subr.mxu0 %v31
  %34 = vmatpush1.msra.mxu0 %v29
  %35 = vmatprep.subr.mxu0 0.0
  %36 = vmatpush1.msra.mxu0 0.0
  %37 = vmatprep.subr.mxu0 0.0
  %38 = vmatpush1.msra.mxu0 0.0
  %39 = vmatprep.subr.mxu0 0.0
  %40 = vmatpush1.msra.mxu0 0.0
  %41 = vmatprep.subr.mxu0 0.0
  %42 = vmatpush1.msra.mxu0 0.0
  %43 = vmatprep.subr.mxu0 0.0
  %44 = vmatpush1.msra.mxu0 0.0
  %45 = vmatprep.subr.mxu0 0.0
  %46 = vmatpush1.msra.mxu0 0.0
  %47 = vmatprep.subr.mxu0 0.0
  %48 = vmatpush1.msra.mxu0 0.0
  %49 = vmatprep.subr.mxu0 0.0
  %50 = vmatpush1.msra.mxu0 0.0
  %51 = vmatprep.subr.mxu0 0.0
  %52 = vmatpush1.msra.mxu0 0.0
  %53 = vmatprep.subr.mxu0 0.0
  %54 = vmatpush1.msra.mxu0 0.0
  %55 = vmatprep.subr.mxu0 0.0
  %56 = vmatpush1.msra.mxu0 0.0
  %57 = vmatprep.subr.mxu0 0.0
  %58 = vmatpush1.msra.mxu0 0.0
  %59 = vmatprep.subr.mxu0 0.0
  %60 = vmatpush1.msra.mxu0 0.0
  %61 = vmatprep.subr.mxu0 0.0
  %62 = vmatpush1.msra.mxu0 0.0
  %63 = vmatprep.subr.mxu0 0.0
  %64 = vmatpush1.msra.mxu0 0.0
  %65 = vmatprep.subr.mxu0 0.0
  %66 = vmatpush1.msra.mxu0 0.0
  %67 = vmatprep.subr.mxu0 0.0
  %68 = vmatpush1.msra.mxu0 0.0
  %69 = vmatprep.subr.mxu0 0.0
  %70 = vmatpush1.msra.mxu0 0.0
  %71 = vmatprep.subr.mxu0 0.0
  %72 = vmatpush1.msra.mxu0 0.0
  %73 = vmatprep.subr.mxu0 0.0
  %74 = vmatpush1.msra.mxu0 0.0
  %75 = vmatprep.subr.mxu0 0.0
  %76 = vmatpush1.msra.mxu0 0.0
  %77 = vmatprep.subr.mxu0 0.0
  %78 = vmatpush1.msra.mxu0 0.0
  %79 = vmatprep.subr.mxu0 0.0
  %80 = vmatpush1.msra.mxu0 0.0
  %81 = vmatprep.subr.mxu0 0.0
  %82 = vmatpush1.msra.mxu0 0.0
  %83 = vmatprep.subr.mxu0 0.0
  %84 = vmatpush1.msra.mxu0 0.0
  %85 = vmatprep.subr.mxu0 0.0
  %86 = vmatpush1.msra.mxu0 0.0
  %87 = vmatprep.subr.mxu0 0.0
  %88 = vmatpush1.msra.mxu0 0.0
  %89 = vmatprep.subr.mxu0 0.0
  %90 = vmatpush1.msra.mxu0 0.0
  %91 = vmatprep.subr.mxu0 0.0
  %92 = vmatpush1.msra.mxu0 0.0
  %93 = vmatprep.subr.mxu0 0.0
  %94 = vmatpush1.msra.mxu0 0.0
  %95 = vmatprep.subr.mxu0 0.0
  %96 = vmatpush1.msra.mxu0 0.0
  %97 = vmatprep.mubr.f32.mxu0 0.0
  %98 = vmatmul.mubr.f32.gmra.mrb[0].mxu0 %v26
  %v99 = vpop.f32.mrb[0].mxu0
  %v100 = vadd.f32 %v20, %v99
  %v101 = vpop.f32.mrb[0].mxu0
  %v102 = vadd.f32 %v20, %v101
  %103 = vdwg.mxu0
  %v104 = vmax.f32 %v100, 0.0
  %v105 = vmax.f32 %v102, 0.0
  %106 = vst [vmem:[%s3] sm:$0xff] %v104
  %107 = vst [vmem:[%s3 + $0x8] sm:$0xff] %v105
  %s108 = scalar_lea.vmem %s0, 8
  %v109 = vld [vmem:[%s108] sm:$0xff]
  %v111 = vcombine.high %v109, %v109
  %v112 = vsel %vm28, %v109, 0
  %v114 = vsel %vm28, %v111, 0
  %116 = vmatprep.subr.mxu0 %v114
  %117 = vmatpush1.msra.mxu0 %v112
  %118 = vmatprep.subr.mxu0 0.0
  %119 = vmatpush1.msra.mxu0 0.0
  %120 = vmatprep.subr.mxu0 0.0
  %121 = vmatpush1.msra.mxu0 0.0
  %122 = vmatprep.subr.mxu0 0.0
  %123 = vmatpush1.msra.mxu0 0.0
  %124 = vmatprep.subr.mxu0 0.0
  %125 = vmatpush1.msra.mxu0 0.0
  %126 = vmatprep.subr.mxu0 0.0
  %127 = vmatpush1.msra.mxu0 0.0
  %128 = vmatprep.subr.mxu0 0.0
  %129 = vmatpush1.msra.mxu0 0.0
  %130 = vmatprep.subr.mxu0 0.0
  %131 = vmatpush1.msra.mxu0 0.0
  %132 = vmatprep.subr.mxu0 0.0
  %133 = vmatpush1.msra.mxu0 0.0
  %134 = vmatprep.subr.mxu0 0.0
  %135 = vmatpush1.msra.mxu0 0.0
  %136 = vmatprep.subr.mxu0 0.0
  %137 = vmatpush1.msra.mxu0 0.0
  %138 = vmatprep.subr.mxu0 0.0
  %139 = vmatpush1.msra.mxu0 0.0
  %140 = vmatprep.subr.mxu0 0.0
  %141 = vmatpush1.msra.mxu0 0.0
  %142 = vmatprep.subr.mxu0 0.0
  %143 = vmatpush1.msra.mxu0 0.0
  %144 = vmatprep.subr.mxu0 0.0
  %145 = vmatpush1.msra.mxu0 0.0
  %146 = vmatprep.subr.mxu0 0.0
  %147 = vmatpush1.msra.mxu0 0.0
  %148 = vmatprep.subr.mxu0 0.0
  %149 = vmatpush1.msra.mxu0 0.0
  %150 = vmatprep.subr.mxu0 0.0
  %151 = vmatpush1.msra.mxu0 0.0
  %152 = vmatprep.subr.mxu0 0.0
  %153 = vmatpush1.msra.mxu0 0.0
  %154 = vmatprep.subr.mxu0 0.0
  %155 = vmatpush1.msra.mxu0 0.0
  %156 = vmatprep.subr.mxu0 0.0
  %157 = vmatpush1.msra.mxu0 0.0
  %158 = vmatprep.subr.mxu0 0.0
  %159 = vmatpush1.msra.mxu0 0.0
  %160 = vmatprep.subr.mxu0 0.0
  %161 = vmatpush1.msra.mxu0 0.0
  %162 = vmatprep.subr.mxu0 0.0
  %163 = vmatpush1.msra.mxu0 0.0
  %164 = vmatprep.subr.mxu0 0.0
  %165 = vmatpush1.msra.mxu0 0.0
  %166 = vmatprep.subr.mxu0 0.0
  %167 = vmatpush1.msra.mxu0 0.0
  %168 = vmatprep.subr.mxu0 0.0
  %169 = vmatpush1.msra.mxu0 0.0
  %170 = vmatprep.subr.mxu0 0.0
  %171 = vmatpush1.msra.mxu0 0.0
  %172 = vmatprep.subr.mxu0 0.0
  %173 = vmatpush1.msra.mxu0 0.0
  %174 = vmatprep.subr.mxu0 0.0
  %175 = vmatpush1.msra.mxu0 0.0
  %176 = vmatprep.subr.mxu0 0.0
  %177 = vmatpush1.msra.mxu0 0.0
  %178 = vmatprep.subr.mxu0 0.0
  %179 = vmatpush1.msra.mxu0 0.0
  %180 = vmatprep.mubr.f32.mxu0 0.0
  %181 = vmatmul.mubr.f32.gmra.mrb[0].mxu0 %v26
  %v182 = vpop.f32.mrb[0].mxu0
  %v183 = vadd.f32 %v20, %v182
  %v184 = vpop.f32.mrb[0].mxu0
  %v185 = vadd.f32 %v20, %v184
  %186 = vdwg.mxu0
  %v187 = vmax.f32 %v183, 0.0
  %v188 = vmax.f32 %v185, 0.0
  %s189 = scalar_lea.vmem %s3, 16
  %190 = vst [vmem:[%s189] sm:$0xff] %v187
  %191 = vst [vmem:[%s189 + $0x8] sm:$0xff] %v188
  // Predicated region
  $region14: #{std_conv.3} parent=0 // pred_check
    _
  $region15: #{std_conv.3} parent=0 // pred_check_branch
    %193 = sbr.rel (0) target = $region17
  $region16: #{std_conv.3} parent=0 // pred_region
    _
  $region17: #{std_conv.3} parent=0 // pred_fallthru
    _
  // Predicated region
  $region18: #{std_conv.3} parent=0 // pred_check
    _
  $region19: #{std_conv.3} parent=0 // pred_check_branch
    %195 = sbr.rel (0) target = $region21
  $region20: #{std_conv.3} parent=0 // pred_region
    _
  $region21: #{std_conv.3} parent=0 // pred_fallthru
    _

</llo_original>
